<compile_context>
chip_gen: v5e
topology: v5e:2x2
jax: 0.10.0
libtpu: 0.0.40
codegen_flags: <defaults>
</compile_context>

<pallas_src>
import functools

import jax
import jax.numpy as jnp
from jax.experimental import pallas as pl
from jax.experimental.pallas import tpu as pltpu


# ---------------------------------------------------------------------------
# Kernel
# ---------------------------------------------------------------------------
def _decoder_layer_kernel(
    x_ref,      # (B*Sq, dv)
    enc_ref,    # (B*Se, dv)
    w_ref,      # packed weight slab (rows, 128)
    out_ref,    # (B*Sq, dv)
    *, n_heads: int, dim_val: int, dim_attn: int, dim_ff: int,
    sq: int, se: int, batch: int,
):
    f32 = jnp.float32
    H, dv, da, dff = n_heads, dim_val, dim_attn, dim_ff
    hda, hdv = H * da, H * dv
    rq, rk = batch * sq, batch * se
    inv_scale = 1.0 / (float(da) ** 0.5)

    # Static row offsets into the packed slab (all multiples of 8).
    r_qkv1 = 0
    r_qkv2 = r_qkv1 + dv
    r_w1 = r_qkv2 + dv
    r_wo = r_w1 + dv
    r_w2 = r_wo + hdv
    r_pv = r_w2 + dff
    r_bs = r_pv + 8
    r_bc = r_bs + rq

    x = x_ref[...].astype(f32)
    enc = enc_ref[...].astype(f32)

    wqkv1 = w_ref[r_qkv1:r_qkv1 + dv, 0:2 * hda + hdv]   # (dv, 2*hda+hdv) [Q|K|V]
    wqkv2 = w_ref[r_qkv2:r_qkv2 + dv, 0:2 * hda + hdv]
    w1 = w_ref[r_w1:r_w1 + dv, 0:dff]                    # (dv, dff)
    wo_blk = w_ref[r_wo:r_wo + hdv, 0:2 * dv]            # (hdv, 2*dv) [Wo1|Wo2]
    w2 = w_ref[r_w2:r_w2 + dff, 0:dv]                    # (dff, dv)
    pv = w_ref[r_pv:r_pv + 8, :]                         # biases / LN params
    bias_self = w_ref[r_bs:r_bs + rq, 0:rq]              # (rq, rq) block-diag bias
    bias_cross = w_ref[r_bc:r_bc + rq, 0:rk]             # (rq, rk)

    wo1 = wo_blk[:, 0:dv]
    wo2 = wo_blk[:, dv:2 * dv]
    b1 = pv[0:1, 0:dff]
    b2 = pv[1:2, 0:dv]
    g1 = pv[2:3, 0:dv]
    be1 = pv[3:4, 0:dv]
    g2 = pv[4:5, 0:dv]
    be2 = pv[5:6, 0:dv]
    g3 = pv[6:7, 0:dv]
    be3 = pv[7:8, 0:dv]

    def layernorm(v, g, be):
        mu = jnp.mean(v, axis=-1, keepdims=True)
        var = jnp.mean((v - mu) ** 2, axis=-1, keepdims=True)
        return (v - mu) * jax.lax.rsqrt(var + 1e-5) * g + be

    def mha(q_src, kv_src, wqkv, wo, bias):
        # Fused projections: one wide matmul for Q|K|V (self-attn) or one for Q
        # and one for K|V (cross-attn).
        if q_src is kv_src:
            qkv = jnp.dot(q_src, wqkv, preferred_element_type=f32)
            q_all = qkv[:, 0:hda]
            k_all = qkv[:, hda:2 * hda]
            v_all = qkv[:, 2 * hda:2 * hda + hdv]
        else:
            q_all = jnp.dot(q_src, wqkv[:, 0:hda], preferred_element_type=f32)
            kv = jnp.dot(kv_src, wqkv[:, hda:2 * hda + hdv],
                         preferred_element_type=f32)
            k_all = kv[:, 0:hda]
            v_all = kv[:, hda:hda + hdv]

        outs = []
        for h in range(H):                     # static unroll over heads
            qh = q_all[:, h * da:(h + 1) * da]
            kh = k_all[:, h * da:(h + 1) * da]
            vh = v_all[:, h * dv:(h + 1) * dv]
            s = jax.lax.dot_general(
                qh, kh, (((1,), (1,)), ((), ())),
                preferred_element_type=f32) * inv_scale + bias
            s = s - jnp.max(s, axis=-1, keepdims=True)
            p = jnp.exp(s)
            p = p * pl.reciprocal(jnp.sum(p, axis=-1, keepdims=True), approx=False)
            outs.append(jnp.dot(p, vh, preferred_element_type=f32))
        ocat = jnp.concatenate(outs, axis=-1)                 # (rq, hdv)
        return jnp.dot(ocat, wo, preferred_element_type=f32)  # (rq, dv)

    # dropout == identity (eval mode)
    # 1) self attention + residual + norm1
    a = mha(x, x, wqkv1, wo1, bias_self)
    x = layernorm(x + a, g1, be1)

    # 2) cross attention (kv = enc) + residual + norm2
    a = mha(x, enc, wqkv2, wo2, bias_cross)
    x = layernorm(x + a, g2, be2)

    # 3) feed-forward + residual + norm3
    hid = jnp.maximum(jnp.dot(x, w1, preferred_element_type=f32) + b1, 0.0)
    ff = jnp.dot(hid, w2, preferred_element_type=f32) + b2
    x = layernorm(x + ff, g3, be3)

    out_ref[...] = x.astype(out_ref.dtype)


# ---------------------------------------------------------------------------
# Weight packing (wrapper-side, plain JAX)
# ---------------------------------------------------------------------------
def _fuse_attention_block(wq, wk, wv, wo):
    """(H,dv,da),(H,dv,da),(H,dv,dv),(H,dv,dv) -> fused QKV (dv, 2*H*da+H*dv)
    and fused output projection (H*dv, dv)."""
    H, dv, da = wq.shape
    dvv = wv.shape[2]
    wq_f = jnp.swapaxes(wq, 0, 1).reshape(dv, H * da)
    wk_f = jnp.swapaxes(wk, 0, 1).reshape(dv, H * da)
    wv_f = jnp.swapaxes(wv, 0, 1).reshape(dv, H * dvv)
    wo_f = wo.reshape(H * wo.shape[1], wo.shape[2])
    return jnp.concatenate([wq_f, wk_f, wv_f], axis=1), wo_f


def _block_diag_bias(n_row_groups, rows_per_group, n_col_groups, cols_per_group):
    rb = jnp.repeat(jnp.arange(n_row_groups), rows_per_group)
    cb = jnp.repeat(jnp.arange(n_col_groups), cols_per_group)
    return jnp.where(rb[:, None] == cb[None, :], 0.0, -1e30).astype(jnp.float32)


def pack_weights(params, *, n_heads, dim_val, dim_attn, dim_ff, sq, se, batch):
    H, dv, da, dff = n_heads, dim_val, dim_attn, dim_ff
    hda, hdv = H * da, H * dv
    rq, rk = batch * sq, batch * se

    lanes = max(2 * hda + hdv, dff, 2 * dv, rq, rk, 128)
    lanes = ((lanes + 127) // 128) * 128

    def padc(a):
        a = a.astype(jnp.float32)
        return jnp.pad(a, ((0, 0), (0, lanes - a.shape[1])))

    qkv1, wo1 = _fuse_attention_block(params["wq1"], params["wk1"],
                                      params["wv1"], params["wo1"])
    qkv2, wo2 = _fuse_attention_block(params["wq2"], params["wk2"],
                                      params["wv2"], params["wo2"])

    pv = jnp.zeros((8, lanes), jnp.float32)
    pv = pv.at[0, :dff].set(params["b1"][0])
    pv = pv.at[1, :dv].set(params["b2"][0])
    pv = pv.at[2, :dv].set(params["g1"][0])
    pv = pv.at[3, :dv].set(params["be1"][0])
    pv = pv.at[4, :dv].set(params["g2"][0])
    pv = pv.at[5, :dv].set(params["be2"][0])
    pv = pv.at[6, :dv].set(params["g3"][0])
    pv = pv.at[7, :dv].set(params["be3"][0])

    bias_self = _block_diag_bias(batch, sq, batch, sq)    # (rq, rq)
    bias_cross = _block_diag_bias(batch, sq, batch, se)   # (rq, rk)

    slab = jnp.concatenate([
        padc(qkv1),                                  # rows [0, dv)
        padc(qkv2),                                  # rows [dv, 2*dv)
        padc(params["w1"]),                          # rows [2*dv, 3*dv)
        padc(jnp.concatenate([wo1, wo2], axis=1)),   # rows [3*dv, 3*dv+hdv)
        padc(params["w2"]),                          # next dff rows
        pv,                                          # 8 rows of biases / LN
        padc(bias_self),                             # rq rows
        padc(bias_cross),                            # rq rows
    ], axis=0)

    pad_rows = (-slab.shape[0]) % 8
    if pad_rows:
        slab = jnp.pad(slab, ((0, pad_rows), (0, 0)))
    return slab


# ---------------------------------------------------------------------------
# Wrapper
# ---------------------------------------------------------------------------
def decoder_layer(x, enc, params, *, n_heads: int, dim_attn: int):
    B, Sq, dv = x.shape
    _, Se, _ = enc.shape
    dff = params["w1"].shape[1]

    slab = pack_weights(params, n_heads=n_heads, dim_val=dv, dim_attn=dim_attn,
                        dim_ff=dff, sq=Sq, se=Se, batch=B)

    x2 = x.reshape(B * Sq, dv)
    enc2 = enc.reshape(B * Se, dv)

    kernel = functools.partial(
        _decoder_layer_kernel, n_heads=n_heads, dim_val=dv, dim_attn=dim_attn,
        dim_ff=dff, sq=Sq, se=Se, batch=B)

    vmem = pl.BlockSpec(memory_space=pltpu.MemorySpace.VMEM)
    out2 = pl.pallas_call(
        kernel,
        out_shape=jax.ShapeDtypeStruct((B * Sq, dv), x.dtype),
        in_specs=[vmem, vmem, vmem],   # whole arrays resident in VMEM, no grid
        out_specs=vmem,
    )(x2, enc2, slab)
    return out2.reshape(B, Sq, dv)


# ---------------------------------------------------------------------------
# Pure-JAX reference (mirrors the PyTorch forward, eval mode)
# ---------------------------------------------------------------------------
def decoder_layer_ref(x, enc, params, *, n_heads: int, dim_attn: int):
    def mha(q_in, kv_in, wq, wk, wv, wo):
        out = 0.0
        for h in range(n_heads):
            q = q_in @ wq[h]
            k = kv_in @ wk[h]
            v = kv_in @ wv[h]
            s = (q @ jnp.swapaxes(k, -1, -2)) / jnp.sqrt(jnp.float32(dim_attn))
            p = jax.nn.softmax(s, axis=-1)
            out = out + (p @ v) @ wo[h]
        return out

    def layernorm(v, g, b):
        mu = jnp.mean(v, axis=-1, keepdims=True)
        var = jnp.mean((v - mu) ** 2, axis=-1, keepdims=True)
        return (v - mu) * jax.lax.rsqrt(var + 1e-5) * g + b

    p = params
    a = mha(x, x, p["wq1"], p["wk1"], p["wv1"], p["wo1"])
    x = layernorm(x + a, p["g1"], p["be1"])
    a = mha(x, enc, p["wq2"], p["wk2"], p["wv2"], p["wo2"])
    x = layernorm(x + a, p["g2"], p["be2"])
    h = jnp.maximum(x @ p["w1"] + p["b1"], 0.0)
    ff = h @ p["w2"] + p["b2"]
    x = layernorm(x + ff, p["g3"], p["be3"])
    return x


# ---------------------------------------------------------------------------
# Deterministic parameter construction
# ---------------------------------------------------------------------------
def make_params(key, dim_val, dim_attn, dim_ff, n_heads):
    keys = jax.random.split(key, 16)
    ki = iter(keys)

    def rnd(k, shape, scale=0.1):
        return jax.random.normal(k, shape, jnp.float32) * scale

    def attn_block_params(kq, kk, kv, ko):
        wq = rnd(kq, (n_heads, dim_val, dim_attn))
        wk = rnd(kk, (n_heads, dim_val, dim_attn))
        wv = rnd(kv, (n_heads, dim_val, dim_val))
        # fc: Linear(n_heads*dim_val, dim_val, bias=False); torch weight is
        # (dim_val, n_heads*dim_val).  Fold the stack(-1)/flatten interleave by
        # slicing columns h::n_heads and transposing -> per-head (dv, dv).
        wfc = rnd(ko, (dim_val, n_heads * dim_val))
        wo = jnp.stack([wfc[:, h::n_heads].T for h in range(n_heads)], axis=0)
        return wq, wk, wv, wo

    wq1, wk1, wv1, wo1 = attn_block_params(next(ki), next(ki), next(ki), next(ki))
    wq2, wk2, wv2, wo2 = attn_block_params(next(ki), next(ki), next(ki), next(ki))

    w1 = rnd(next(ki), (dim_val, dim_ff))
    b1 = rnd(next(ki), (1, dim_ff))
    w2 = rnd(next(ki), (dim_ff, dim_val))
    b2 = rnd(next(ki), (1, dim_val))

    g1 = 1.0 + rnd(next(ki), (1, dim_val))
    be1 = rnd(next(ki), (1, dim_val))
    g2 = 1.0 + rnd(next(ki), (1, dim_val))
    be2 = rnd(next(ki), (1, dim_val))
    k_last = jax.random.split(keys[-1], 2)
    g3 = 1.0 + rnd(k_last[0], (1, dim_val))
    be3 = rnd(k_last[1], (1, dim_val))

    return dict(
        wq1=wq1, wk1=wk1, wv1=wv1, wo1=wo1,
        wq2=wq2, wk2=wk2, wv2=wv2, wo2=wo2,
        w1=w1, b1=b1, w2=w2, b2=b2,
        g1=g1, be1=be1, g2=g2, be2=be2, g3=g3, be3=be3,
    )


# ---------------------------------------------------------------------------
if __name__ == "__main__":
    B, Sq, Se = 2, 8, 12
    dim_val, dim_attn, dim_ff, n_heads = 32, 16, 64, 2

    key = jax.random.PRNGKey(0)
    kx, ke, kp = jax.random.split(key, 3)
    x = jax.random.normal(kx, (B, Sq, dim_val), jnp.float32)
    enc = jax.random.normal(ke, (B, Se, dim_val), jnp.float32)
    params = make_params(kp, dim_val, dim_attn, dim_ff, n_heads)

    out = decoder_layer(x, enc, params, n_heads=n_heads, dim_attn=dim_attn)
    out = jax.block_until_ready(out)

    ref = decoder_layer_ref(x, enc, params, n_heads=n_heads, dim_attn=dim_attn)
    assert out.shape == (B, Sq, dim_val)
    err = float(jnp.max(jnp.abs(out - ref)))
    assert jnp.allclose(out, ref, atol=1e-4, rtol=1e-4), err
    print("KERNEL_OK")
</pallas_src>

<mosaic_0001>
module attributes {stable_mosaic.version = 11 : i64} {
  func.func @_decoder_layer_kernel(%arg0: memref<16x32xf32, #tpu.memory_space<vmem>>, %arg1: memref<24x32xf32, #tpu.memory_space<vmem>>, %arg2: memref<264x128xf32, #tpu.memory_space<vmem>>, %arg3: memref<16x32xf32, #tpu.memory_space<vmem>>) attributes {dimension_semantics = [], scalar_prefetch = 0 : i64, scratch_operands = 0 : i64, tpu.core_type = #tpu.core_type<tc>} {
    %c0 = arith.constant 0 : index
    %c0_0 = arith.constant 0 : index
    %0 = vector.load %arg0[%c0, %c0_0] : memref<16x32xf32, #tpu.memory_space<vmem>>, vector<16x32xf32>
    %c0_1 = arith.constant 0 : index
    %c0_2 = arith.constant 0 : index
    %1 = vector.load %arg1[%c0_1, %c0_2] : memref<24x32xf32, #tpu.memory_space<vmem>>, vector<24x32xf32>
    %c0_3 = arith.constant 0 : index
    %c0_4 = arith.constant 0 : index
    %2 = vector.load %arg2[%c0_3, %c0_4] : memref<264x128xf32, #tpu.memory_space<vmem>>, vector<32x128xf32>
    %c32 = arith.constant 32 : index
    %c0_5 = arith.constant 0 : index
    %3 = vector.load %arg2[%c32, %c0_5] : memref<264x128xf32, #tpu.memory_space<vmem>>, vector<32x128xf32>
    %c64 = arith.constant 64 : index
    %c0_6 = arith.constant 0 : index
    %4 = vector.load %arg2[%c64, %c0_6] : memref<264x128xf32, #tpu.memory_space<vmem>>, vector<32x64xf32>
    %c96 = arith.constant 96 : index
    %c0_7 = arith.constant 0 : index
    %5 = vector.load %arg2[%c96, %c0_7] : memref<264x128xf32, #tpu.memory_space<vmem>>, vector<64x64xf32>
    %c160 = arith.constant 160 : index
    %c0_8 = arith.constant 0 : index
    %6 = vector.load %arg2[%c160, %c0_8] : memref<264x128xf32, #tpu.memory_space<vmem>>, vector<64x32xf32>
    %c224 = arith.constant 224 : index
    %c0_9 = arith.constant 0 : index
    %7 = vector.load %arg2[%c224, %c0_9] : memref<264x128xf32, #tpu.memory_space<vmem>>, vector<8x128xf32>
    %c232 = arith.constant 232 : index
    %c0_10 = arith.constant 0 : index
    %8 = vector.load %arg2[%c232, %c0_10] : memref<264x128xf32, #tpu.memory_space<vmem>>, vector<16x16xf32>
    %c248 = arith.constant 248 : index
    %c0_11 = arith.constant 0 : index
    %9 = vector.load %arg2[%c248, %c0_11] : memref<264x128xf32, #tpu.memory_space<vmem>>, vector<16x24xf32>
    %10 = vector.extract_strided_slice %5 {offsets = [0, 0], sizes = [64, 32], strides = [1, 1]} : vector<64x64xf32> to vector<64x32xf32>
    %11 = vector.extract_strided_slice %5 {offsets = [0, 32], sizes = [64, 32], strides = [1, 1]} : vector<64x64xf32> to vector<64x32xf32>
    %12 = vector.extract_strided_slice %7 {offsets = [0, 0], sizes = [1, 64], strides = [1, 1]} : vector<8x128xf32> to vector<1x64xf32>
    %13 = vector.extract_strided_slice %7 {offsets = [1, 0], sizes = [1, 32], strides = [1, 1]} : vector<8x128xf32> to vector<1x32xf32>
    %14 = vector.extract_strided_slice %7 {offsets = [2, 0], sizes = [1, 32], strides = [1, 1]} : vector<8x128xf32> to vector<1x32xf32>
    %15 = vector.extract_strided_slice %7 {offsets = [3, 0], sizes = [1, 32], strides = [1, 1]} : vector<8x128xf32> to vector<1x32xf32>
    %16 = vector.extract_strided_slice %7 {offsets = [4, 0], sizes = [1, 32], strides = [1, 1]} : vector<8x128xf32> to vector<1x32xf32>
    %17 = vector.extract_strided_slice %7 {offsets = [5, 0], sizes = [1, 32], strides = [1, 1]} : vector<8x128xf32> to vector<1x32xf32>
    %18 = vector.extract_strided_slice %7 {offsets = [6, 0], sizes = [1, 32], strides = [1, 1]} : vector<8x128xf32> to vector<1x32xf32>
    %19 = vector.extract_strided_slice %7 {offsets = [7, 0], sizes = [1, 32], strides = [1, 1]} : vector<8x128xf32> to vector<1x32xf32>
    %cst = arith.constant dense<0.000000e+00> : vector<16x128xf32>
    %20 = tpu.matmul %0, %2, %cst {dimension_numbers = #tpu.dot_dimension_numbers<[1], [0], [0], [1], [0, 0, 1, 1], [], []>} : vector<16x32xf32>, vector<32x128xf32>, vector<16x128xf32> -> vector<16x128xf32>
    %21 = vector.extract_strided_slice %20 {offsets = [0, 0], sizes = [16, 32], strides = [1, 1]} : vector<16x128xf32> to vector<16x32xf32>
    %22 = vector.extract_strided_slice %20 {offsets = [0, 32], sizes = [16, 32], strides = [1, 1]} : vector<16x128xf32> to vector<16x32xf32>
    %23 = vector.extract_strided_slice %20 {offsets = [0, 64], sizes = [16, 64], strides = [1, 1]} : vector<16x128xf32> to vector<16x64xf32>
    %24 = vector.extract_strided_slice %21 {offsets = [0, 0], sizes = [16, 16], strides = [1, 1]} : vector<16x32xf32> to vector<16x16xf32>
    %25 = vector.extract_strided_slice %22 {offsets = [0, 0], sizes = [16, 16], strides = [1, 1]} : vector<16x32xf32> to vector<16x16xf32>
    %26 = vector.extract_strided_slice %23 {offsets = [0, 0], sizes = [16, 32], strides = [1, 1]} : vector<16x64xf32> to vector<16x32xf32>
    %cst_12 = arith.constant dense<0.000000e+00> : vector<16x16xf32>
    %27 = tpu.matmul %24, %25, %cst_12 {dimension_numbers = #tpu.dot_dimension_numbers<[1], [1], [0], [0], [0, 0, 1, 0], [], []>} : vector<16x16xf32>, vector<16x16xf32>, vector<16x16xf32> -> vector<16x16xf32>
    %cst_13 = arith.constant 2.500000e-01 : f32
    %28 = vector.broadcast %cst_13 : f32 to vector<16x16xf32>
    %29 = arith.mulf %27, %28 : vector<16x16xf32>
    %30 = arith.addf %29, %8 : vector<16x16xf32>
    %cst_14 = arith.constant dense<0xFF800000> : vector<16xf32>
    %31 = vector.multi_reduction <maximumf>, %30, %cst_14 [1] : vector<16x16xf32> to vector<16xf32>
    %32 = vector.shape_cast %31 : vector<16xf32> to vector<16x1xf32>
    %33 = vector.broadcast %32 : vector<16x1xf32> to vector<16x16xf32>
    %34 = arith.subf %30, %33 : vector<16x16xf32>
    %35 = math.exp %34 : vector<16x16xf32>
    %cst_15 = arith.constant dense<0.000000e+00> : vector<16xf32>
    %36 = vector.multi_reduction <add>, %35, %cst_15 [1] : vector<16x16xf32> to vector<16xf32>
    %37 = vector.shape_cast %36 : vector<16xf32> to vector<16x1xf32>
    %38 = tpu.reciprocal %37 : vector<16x1xf32> -> vector<16x1xf32>
    %39 = vector.broadcast %38 : vector<16x1xf32> to vector<16x16xf32>
    %40 = arith.mulf %35, %39 : vector<16x16xf32>
    %cst_16 = arith.constant dense<0.000000e+00> : vector<16x32xf32>
    %41 = tpu.matmul %40, %26, %cst_16 {dimension_numbers = #tpu.dot_dimension_numbers<[1], [0], [0], [1], [0, 0, 1, 1], [], []>} : vector<16x16xf32>, vector<16x32xf32>, vector<16x32xf32> -> vector<16x32xf32>
    %42 = vector.extract_strided_slice %21 {offsets = [0, 16], sizes = [16, 16], strides = [1, 1]} : vector<16x32xf32> to vector<16x16xf32>
    %43 = vector.extract_strided_slice %22 {offsets = [0, 16], sizes = [16, 16], strides = [1, 1]} : vector<16x32xf32> to vector<16x16xf32>
    %44 = vector.extract_strided_slice %23 {offsets = [0, 32], sizes = [16, 32], strides = [1, 1]} : vector<16x64xf32> to vector<16x32xf32>
    %cst_17 = arith.constant dense<0.000000e+00> : vector<16x16xf32>
    %45 = tpu.matmul %42, %43, %cst_17 {dimension_numbers = #tpu.dot_dimension_numbers<[1], [1], [0], [0], [0, 0, 1, 0], [], []>} : vector<16x16xf32>, vector<16x16xf32>, vector<16x16xf32> -> vector<16x16xf32>
    %cst_18 = arith.constant 2.500000e-01 : f32
    %46 = vector.broadcast %cst_18 : f32 to vector<16x16xf32>
    %47 = arith.mulf %45, %46 : vector<16x16xf32>
    %48 = arith.addf %47, %8 : vector<16x16xf32>
    %cst_19 = arith.constant dense<0xFF800000> : vector<16xf32>
    %49 = vector.multi_reduction <maximumf>, %48, %cst_19 [1] : vector<16x16xf32> to vector<16xf32>
    %50 = vector.shape_cast %49 : vector<16xf32> to vector<16x1xf32>
    %51 = vector.broadcast %50 : vector<16x1xf32> to vector<16x16xf32>
    %52 = arith.subf %48, %51 : vector<16x16xf32>
    %53 = math.exp %52 : vector<16x16xf32>
    %cst_20 = arith.constant dense<0.000000e+00> : vector<16xf32>
    %54 = vector.multi_reduction <add>, %53, %cst_20 [1] : vector<16x16xf32> to vector<16xf32>
    %55 = vector.shape_cast %54 : vector<16xf32> to vector<16x1xf32>
    %56 = tpu.reciprocal %55 : vector<16x1xf32> -> vector<16x1xf32>
    %57 = vector.broadcast %56 : vector<16x1xf32> to vector<16x16xf32>
    %58 = arith.mulf %53, %57 : vector<16x16xf32>
    %cst_21 = arith.constant dense<0.000000e+00> : vector<16x32xf32>
    %59 = tpu.matmul %58, %44, %cst_21 {dimension_numbers = #tpu.dot_dimension_numbers<[1], [0], [0], [1], [0, 0, 1, 1], [], []>} : vector<16x16xf32>, vector<16x32xf32>, vector<16x32xf32> -> vector<16x32xf32>
    %60 = tpu.concatenate %41, %59 in 1 : vector<16x32xf32>, vector<16x32xf32> -> vector<16x64xf32>
    %cst_22 = arith.constant dense<0.000000e+00> : vector<16x32xf32>
    %61 = tpu.matmul %60, %10, %cst_22 {dimension_numbers = #tpu.dot_dimension_numbers<[1], [0], [0], [1], [0, 0, 1, 1], [], []>} : vector<16x64xf32>, vector<64x32xf32>, vector<16x32xf32> -> vector<16x32xf32>
    %62 = arith.addf %0, %61 : vector<16x32xf32>
    %cst_23 = arith.constant dense<0.000000e+00> : vector<16xf32>
    %63 = vector.multi_reduction <add>, %62, %cst_23 [1] : vector<16x32xf32> to vector<16xf32>
    %64 = vector.shape_cast %63 : vector<16xf32> to vector<16x1xf32>
    %cst_24 = arith.constant 3.200000e+01 : f32
    %65 = vector.broadcast %cst_24 : f32 to vector<16x1xf32>
    %66 = arith.divf %64, %65 : vector<16x1xf32>
    %67 = vector.broadcast %66 : vector<16x1xf32> to vector<16x32xf32>
    %68 = arith.subf %62, %67 : vector<16x32xf32>
    %69 = arith.mulf %68, %68 : vector<16x32xf32>
    %cst_25 = arith.constant dense<0.000000e+00> : vector<16xf32>
    %70 = vector.multi_reduction <add>, %69, %cst_25 [1] : vector<16x32xf32> to vector<16xf32>
    %71 = vector.shape_cast %70 : vector<16xf32> to vector<16x1xf32>
    %cst_26 = arith.constant 3.200000e+01 : f32
    %72 = vector.broadcast %cst_26 : f32 to vector<16x1xf32>
    %73 = arith.divf %71, %72 : vector<16x1xf32>
    %74 = vector.broadcast %66 : vector<16x1xf32> to vector<16x32xf32>
    %75 = arith.subf %62, %74 : vector<16x32xf32>
    %cst_27 = arith.constant 9.99999974E-6 : f32
    %76 = vector.broadcast %cst_27 : f32 to vector<16x1xf32>
    %77 = arith.addf %73, %76 : vector<16x1xf32>
    %78 = math.rsqrt %77 : vector<16x1xf32>
    %79 = vector.broadcast %78 : vector<16x1xf32> to vector<16x32xf32>
    %80 = arith.mulf %75, %79 : vector<16x32xf32>
    %81 = vector.broadcast %14 : vector<1x32xf32> to vector<16x32xf32>
    %82 = arith.mulf %80, %81 : vector<16x32xf32>
    %83 = vector.broadcast %15 : vector<1x32xf32> to vector<16x32xf32>
    %84 = arith.addf %82, %83 : vector<16x32xf32>
    %85 = vector.extract_strided_slice %3 {offsets = [0, 0], sizes = [32, 32], strides = [1, 1]} : vector<32x128xf32> to vector<32x32xf32>
    %cst_28 = arith.constant dense<0.000000e+00> : vector<16x32xf32>
    %86 = tpu.matmul %84, %85, %cst_28 {dimension_numbers = #tpu.dot_dimension_numbers<[1], [0], [0], [1], [0, 0, 1, 1], [], []>} : vector<16x32xf32>, vector<32x32xf32>, vector<16x32xf32> -> vector<16x32xf32>
    %87 = vector.extract_strided_slice %3 {offsets = [0, 32], sizes = [32, 96], strides = [1, 1]} : vector<32x128xf32> to vector<32x96xf32>
    %cst_29 = arith.constant dense<0.000000e+00> : vector<24x96xf32>
    %88 = tpu.matmul %1, %87, %cst_29 {dimension_numbers = #tpu.dot_dimension_numbers<[1], [0], [0], [1], [0, 0, 1, 1], [], []>} : vector<24x32xf32>, vector<32x96xf32>, vector<24x96xf32> -> vector<24x96xf32>
    %89 = vector.extract_strided_slice %88 {offsets = [0, 0], sizes = [24, 32], strides = [1, 1]} : vector<24x96xf32> to vector<24x32xf32>
    %90 = vector.extract_strided_slice %88 {offsets = [0, 32], sizes = [24, 64], strides = [1, 1]} : vector<24x96xf32> to vector<24x64xf32>
    %91 = vector.extract_strided_slice %86 {offsets = [0, 0], sizes = [16, 16], strides = [1, 1]} : vector<16x32xf32> to vector<16x16xf32>
    %92 = vector.extract_strided_slice %89 {offsets = [0, 0], sizes = [24, 16], strides = [1, 1]} : vector<24x32xf32> to vector<24x16xf32>
    %93 = vector.extract_strided_slice %90 {offsets = [0, 0], sizes = [24, 32], strides = [1, 1]} : vector<24x64xf32> to vector<24x32xf32>
    %cst_30 = arith.constant dense<0.000000e+00> : vector<16x24xf32>
    %94 = tpu.matmul %91, %92, %cst_30 {dimension_numbers = #tpu.dot_dimension_numbers<[1], [1], [0], [0], [0, 0, 1, 0], [], []>} : vector<16x16xf32>, vector<24x16xf32>, vector<16x24xf32> -> vector<16x24xf32>
    %cst_31 = arith.constant 2.500000e-01 : f32
    %95 = vector.broadcast %cst_31 : f32 to vector<16x24xf32>
    %96 = arith.mulf %94, %95 : vector<16x24xf32>
    %97 = arith.addf %96, %9 : vector<16x24xf32>
    %cst_32 = arith.constant dense<0xFF800000> : vector<16xf32>
    %98 = vector.multi_reduction <maximumf>, %97, %cst_32 [1] : vector<16x24xf32> to vector<16xf32>
    %99 = vector.shape_cast %98 : vector<16xf32> to vector<16x1xf32>
    %100 = vector.broadcast %99 : vector<16x1xf32> to vector<16x24xf32>
    %101 = arith.subf %97, %100 : vector<16x24xf32>
    %102 = math.exp %101 : vector<16x24xf32>
    %cst_33 = arith.constant dense<0.000000e+00> : vector<16xf32>
    %103 = vector.multi_reduction <add>, %102, %cst_33 [1] : vector<16x24xf32> to vector<16xf32>
    %104 = vector.shape_cast %103 : vector<16xf32> to vector<16x1xf32>
    %105 = tpu.reciprocal %104 : vector<16x1xf32> -> vector<16x1xf32>
    %106 = vector.broadcast %105 : vector<16x1xf32> to vector<16x24xf32>
    %107 = arith.mulf %102, %106 : vector<16x24xf32>
    %cst_34 = arith.constant dense<0.000000e+00> : vector<16x32xf32>
    %108 = tpu.matmul %107, %93, %cst_34 {dimension_numbers = #tpu.dot_dimension_numbers<[1], [0], [0], [1], [0, 0, 1, 1], [], []>} : vector<16x24xf32>, vector<24x32xf32>, vector<16x32xf32> -> vector<16x32xf32>
    %109 = vector.extract_strided_slice %86 {offsets = [0, 16], sizes = [16, 16], strides = [1, 1]} : vector<16x32xf32> to vector<16x16xf32>
    %110 = vector.extract_strided_slice %89 {offsets = [0, 16], sizes = [24, 16], strides = [1, 1]} : vector<24x32xf32> to vector<24x16xf32>
    %111 = vector.extract_strided_slice %90 {offsets = [0, 32], sizes = [24, 32], strides = [1, 1]} : vector<24x64xf32> to vector<24x32xf32>
    %cst_35 = arith.constant dense<0.000000e+00> : vector<16x24xf32>
    %112 = tpu.matmul %109, %110, %cst_35 {dimension_numbers = #tpu.dot_dimension_numbers<[1], [1], [0], [0], [0, 0, 1, 0], [], []>} : vector<16x16xf32>, vector<24x16xf32>, vector<16x24xf32> -> vector<16x24xf32>
    %cst_36 = arith.constant 2.500000e-01 : f32
    %113 = vector.broadcast %cst_36 : f32 to vector<16x24xf32>
    %114 = arith.mulf %112, %113 : vector<16x24xf32>
    %115 = arith.addf %114, %9 : vector<16x24xf32>
    %cst_37 = arith.constant dense<0xFF800000> : vector<16xf32>
    %116 = vector.multi_reduction <maximumf>, %115, %cst_37 [1] : vector<16x24xf32> to vector<16xf32>
    %117 = vector.shape_cast %116 : vector<16xf32> to vector<16x1xf32>
    %118 = vector.broadcast %117 : vector<16x1xf32> to vector<16x24xf32>
    %119 = arith.subf %115, %118 : vector<16x24xf32>
    %120 = math.exp %119 : vector<16x24xf32>
    %cst_38 = arith.constant dense<0.000000e+00> : vector<16xf32>
    %121 = vector.multi_reduction <add>, %120, %cst_38 [1] : vector<16x24xf32> to vector<16xf32>
    %122 = vector.shape_cast %121 : vector<16xf32> to vector<16x1xf32>
    %123 = tpu.reciprocal %122 : vector<16x1xf32> -> vector<16x1xf32>
    %124 = vector.broadcast %123 : vector<16x1xf32> to vector<16x24xf32>
    %125 = arith.mulf %120, %124 : vector<16x24xf32>
    %cst_39 = arith.constant dense<0.000000e+00> : vector<16x32xf32>
    %126 = tpu.matmul %125, %111, %cst_39 {dimension_numbers = #tpu.dot_dimension_numbers<[1], [0], [0], [1], [0, 0, 1, 1], [], []>} : vector<16x24xf32>, vector<24x32xf32>, vector<16x32xf32> -> vector<16x32xf32>
    %127 = tpu.concatenate %108, %126 in 1 : vector<16x32xf32>, vector<16x32xf32> -> vector<16x64xf32>
    %cst_40 = arith.constant dense<0.000000e+00> : vector<16x32xf32>
    %128 = tpu.matmul %127, %11, %cst_40 {dimension_numbers = #tpu.dot_dimension_numbers<[1], [0], [0], [1], [0, 0, 1, 1], [], []>} : vector<16x64xf32>, vector<64x32xf32>, vector<16x32xf32> -> vector<16x32xf32>
    %129 = arith.addf %84, %128 : vector<16x32xf32>
    %cst_41 = arith.constant dense<0.000000e+00> : vector<16xf32>
    %130 = vector.multi_reduction <add>, %129, %cst_41 [1] : vector<16x32xf32> to vector<16xf32>
    %131 = vector.shape_cast %130 : vector<16xf32> to vector<16x1xf32>
    %cst_42 = arith.constant 3.200000e+01 : f32
    %132 = vector.broadcast %cst_42 : f32 to vector<16x1xf32>
    %133 = arith.divf %131, %132 : vector<16x1xf32>
    %134 = vector.broadcast %133 : vector<16x1xf32> to vector<16x32xf32>
    %135 = arith.subf %129, %134 : vector<16x32xf32>
    %136 = arith.mulf %135, %135 : vector<16x32xf32>
    %cst_43 = arith.constant dense<0.000000e+00> : vector<16xf32>
    %137 = vector.multi_reduction <add>, %136, %cst_43 [1] : vector<16x32xf32> to vector<16xf32>
    %138 = vector.shape_cast %137 : vector<16xf32> to vector<16x1xf32>
    %cst_44 = arith.constant 3.200000e+01 : f32
    %139 = vector.broadcast %cst_44 : f32 to vector<16x1xf32>
    %140 = arith.divf %138, %139 : vector<16x1xf32>
    %141 = vector.broadcast %133 : vector<16x1xf32> to vector<16x32xf32>
    %142 = arith.subf %129, %141 : vector<16x32xf32>
    %cst_45 = arith.constant 9.99999974E-6 : f32
    %143 = vector.broadcast %cst_45 : f32 to vector<16x1xf32>
    %144 = arith.addf %140, %143 : vector<16x1xf32>
    %145 = math.rsqrt %144 : vector<16x1xf32>
    %146 = vector.broadcast %145 : vector<16x1xf32> to vector<16x32xf32>
    %147 = arith.mulf %142, %146 : vector<16x32xf32>
    %148 = vector.broadcast %16 : vector<1x32xf32> to vector<16x32xf32>
    %149 = arith.mulf %147, %148 : vector<16x32xf32>
    %150 = vector.broadcast %17 : vector<1x32xf32> to vector<16x32xf32>
    %151 = arith.addf %149, %150 : vector<16x32xf32>
    %cst_46 = arith.constant dense<0.000000e+00> : vector<16x64xf32>
    %152 = tpu.matmul %151, %4, %cst_46 {dimension_numbers = #tpu.dot_dimension_numbers<[1], [0], [0], [1], [0, 0, 1, 1], [], []>} : vector<16x32xf32>, vector<32x64xf32>, vector<16x64xf32> -> vector<16x64xf32>
    %153 = vector.broadcast %12 : vector<1x64xf32> to vector<16x64xf32>
    %154 = arith.addf %152, %153 : vector<16x64xf32>
    %cst_47 = arith.constant 0.000000e+00 : f32
    %155 = vector.broadcast %cst_47 : f32 to vector<16x64xf32>
    %156 = arith.maximumf %154, %155 : vector<16x64xf32>
    %cst_48 = arith.constant dense<0.000000e+00> : vector<16x32xf32>
    %157 = tpu.matmul %156, %6, %cst_48 {dimension_numbers = #tpu.dot_dimension_numbers<[1], [0], [0], [1], [0, 0, 1, 1], [], []>} : vector<16x64xf32>, vector<64x32xf32>, vector<16x32xf32> -> vector<16x32xf32>
    %158 = vector.broadcast %13 : vector<1x32xf32> to vector<16x32xf32>
    %159 = arith.addf %157, %158 : vector<16x32xf32>
    %160 = arith.addf %151, %159 : vector<16x32xf32>
    %cst_49 = arith.constant dense<0.000000e+00> : vector<16xf32>
    %161 = vector.multi_reduction <add>, %160, %cst_49 [1] : vector<16x32xf32> to vector<16xf32>
    %162 = vector.shape_cast %161 : vector<16xf32> to vector<16x1xf32>
    %cst_50 = arith.constant 3.200000e+01 : f32
    %163 = vector.broadcast %cst_50 : f32 to vector<16x1xf32>
    %164 = arith.divf %162, %163 : vector<16x1xf32>
    %165 = vector.broadcast %164 : vector<16x1xf32> to vector<16x32xf32>
    %166 = arith.subf %160, %165 : vector<16x32xf32>
    %167 = arith.mulf %166, %166 : vector<16x32xf32>
    %cst_51 = arith.constant dense<0.000000e+00> : vector<16xf32>
    %168 = vector.multi_reduction <add>, %167, %cst_51 [1] : vector<16x32xf32> to vector<16xf32>
    %169 = vector.shape_cast %168 : vector<16xf32> to vector<16x1xf32>
    %cst_52 = arith.constant 3.200000e+01 : f32
    %170 = vector.broadcast %cst_52 : f32 to vector<16x1xf32>
    %171 = arith.divf %169, %170 : vector<16x1xf32>
    %172 = vector.broadcast %164 : vector<16x1xf32> to vector<16x32xf32>
    %173 = arith.subf %160, %172 : vector<16x32xf32>
    %cst_53 = arith.constant 9.99999974E-6 : f32
    %174 = vector.broadcast %cst_53 : f32 to vector<16x1xf32>
    %175 = arith.addf %171, %174 : vector<16x1xf32>
    %176 = math.rsqrt %175 : vector<16x1xf32>
    %177 = vector.broadcast %176 : vector<16x1xf32> to vector<16x32xf32>
    %178 = arith.mulf %173, %177 : vector<16x32xf32>
    %179 = vector.broadcast %18 : vector<1x32xf32> to vector<16x32xf32>
    %180 = arith.mulf %178, %179 : vector<16x32xf32>
    %181 = vector.broadcast %19 : vector<1x32xf32> to vector<16x32xf32>
    %182 = arith.addf %180, %181 : vector<16x32xf32>
    %c0_54 = arith.constant 0 : index
    %c0_55 = arith.constant 0 : index
    %183 = vector.load %arg3[%c0_54, %c0_55] : memref<16x32xf32, #tpu.memory_space<vmem>>, vector<16x32xf32>
    tpu.vector_store %arg3[%c0_54, %c0_55], %182 {strides = array<i32>} : memref<16x32xf32, #tpu.memory_space<vmem>>, vector<16x32xf32>,
    return
  }
}

</mosaic_0001>

<llo_original>
// kernel: tpu_custom_call.1
$region0: #{tpu_custom_call.1}
  #allocation0 [shape = 'u32[]', space=smem, size = 0x4, offset = 0x4, fixed_abs, tag = 'smem constant byte address 0x4 - core index']
  #allocation1 [shape = 'u32[72,128]{1,0:T(1,128)}', space=vmem, size = 0x9000, scoped, tag = 'internal scratch']
  %s0 = inlined_call_operand.hbm [shape: f32[16,32], index: 0, kind: input, shape index: {}]
  %s1 = inlined_call_operand.hbm [shape: f32[24,32], index: 1, kind: input, shape index: {}]
  %s2 = inlined_call_operand.hbm [shape: f32[264,128], index: 2, kind: input, shape index: {}]
  %s3 = inlined_call_operand.hbm [shape: f32[16,32], index: 3, kind: output, shape index: {}]
  %s4 = sld [smem:[#allocation0]]
  $region34: #{tpu_custom_call.1} parent=0
    _
  %s6 = ssub.s32 1, %s4
  %s7 = scalar_select 0, %s6, %s4
  $region1: #{tpu_custom_call.1} parent=0
    #allocation2 [shape = 'u8[8192]{0}', space=vmem, size = 0x2000, scoped, tag = 'input window, operand 0, single buffered']
    #allocation3 [shape = 's32[1]{0}', space=sflag, size = 0x4, scoped, tag = 'scoped memory for tpu_custom_call.1']
    #allocation4 [shape = 's32[1]{0}', space=sflag, size = 0x4, scoped, tag = 'scoped memory for tpu_custom_call.1']
    #allocation5 [shape = 'u8[12288]{0}', space=vmem, size = 0x3000, scoped, tag = 'input window, operand 1, single buffered']
    #allocation6 [shape = 's32[1]{0}', space=sflag, size = 0x4, scoped, tag = 'scoped memory for tpu_custom_call.1']
    #allocation7 [shape = 'u8[135168]{0}', space=vmem, size = 0x21000, scoped, tag = 'input window, operand 2, single buffered']
    #allocation8 [shape = 'u8[8192]{0}', space=vmem, size = 0x2000, scoped, tag = 'output window, operand 0, single buffered']
    %8 = vsyncpa [#allocation3], 0
    %9 = vsyncpa [#allocation6], 0
    %10 = vsyncpa [#allocation4], 0
    // Predicated region
    $region2: #{tpu_custom_call.1} parent=1 // pred_check
      _
    $region3: #{tpu_custom_call.1} parent=1 // pred_check_branch
      %12 = sbr.rel (0) target = $region5
    $region4: #{tpu_custom_call.1} parent=1 // pred_region
      %14 = vsyncadd [#allocation3], 0
      %s15 = sshll.u32 %s0, 4
      %s16 = int_to_ptr.hbm [resolvable:$true] %s15
      %s17 = sshll.u32 [#allocation2], 4
      %s18 = int_to_ptr.vmem [resolvable:$true] %s17
      %23 = dma.hbm_to_vmem [thread:$0]  %s16, 256, %s18, [#allocation3], 128, 128, 8
    $region5: #{tpu_custom_call.1} parent=1 // pred_fallthru
      _
    // Predicated region
    $region6: #{tpu_custom_call.1} parent=1 // pred_check
      _
    $region7: #{tpu_custom_call.1} parent=1 // pred_check_branch
      %25 = sbr.rel (0) target = $region9
    $region8: #{tpu_custom_call.1} parent=1 // pred_region
      %27 = vsyncadd [#allocation6], 0
      %s28 = sshll.u32 %s1, 4
      %s29 = int_to_ptr.hbm [resolvable:$true] %s28
      %s30 = sshll.u32 [#allocation5], 4
      %s31 = int_to_ptr.vmem [resolvable:$true] %s30
      %36 = dma.hbm_to_vmem [thread:$0]  %s29, 384, %s31, [#allocation6], 128, 128, 8
    $region9: #{tpu_custom_call.1} parent=1 // pred_fallthru
      _
    // Predicated region
    $region10: #{tpu_custom_call.1} parent=1 // pred_check
      _
    $region11: #{tpu_custom_call.1} parent=1 // pred_check_branch
      %38 = sbr.rel (0) target = $region13
    $region12: #{tpu_custom_call.1} parent=1 // pred_region
      %40 = vsyncadd [#allocation6], 0
      %s41 = sshll.u32 %s2, 4
      %s42 = int_to_ptr.hbm [resolvable:$true] %s41
      %s43 = sshll.u32 [#allocation7], 4
      %s44 = int_to_ptr.vmem [resolvable:$true] %s43
      %49 = dma.hbm_to_vmem [thread:$0]  %s42, 4224, %s44, [#allocation6], 128, 128, 8
    $region13: #{tpu_custom_call.1} parent=1 // pred_fallthru
      _
    // Predicated region
    $region14: #{tpu_custom_call.1} parent=1 // pred_check
      _
    $region15: #{tpu_custom_call.1} parent=1 // pred_check_branch
      %51 = sbr.rel (0) target = $region17
    $region16: #{tpu_custom_call.1} parent=1 // pred_region
      %53 = dma.done [#allocation3], 256
    $region17: #{tpu_custom_call.1} parent=1 // pred_fallthru
      _
    // Predicated region
    $region18: #{tpu_custom_call.1} parent=1 // pred_check
      _
    $region19: #{tpu_custom_call.1} parent=1 // pred_check_branch
      %55 = sbr.rel (0) target = $region21
    $region20: #{tpu_custom_call.1} parent=1 // pred_region
      %57 = dma.done [#allocation6], 384
    $region21: #{tpu_custom_call.1} parent=1 // pred_fallthru
      _
    // Predicated region
    $region22: #{tpu_custom_call.1} parent=1 // pred_check
      _
    $region23: #{tpu_custom_call.1} parent=1 // pred_check_branch
      %59 = sbr.rel (0) target = $region25
    $region24: #{tpu_custom_call.1} parent=1 // pred_region
      %61 = dma.done [#allocation6], 4224
    $region25: #{tpu_custom_call.1} parent=1 // pred_fallthru
      _
    %v62 = vld [vmem:[#allocation2] sm:$0xff]
    %v63 = vld [vmem:[#allocation2 + $0x8] sm:$0xff]
    %v64 = vld [vmem:[#allocation5] sm:$0xff]
    %v65 = vld [vmem:[#allocation5 + $0x8] sm:$0xff]
    %v66 = vld [vmem:[#allocation5 + $0x10] sm:$0xff]
    %v67 = vld [vmem:[#allocation7] sm:$0xff]
    %v68 = vld [vmem:[#allocation7 + $0x8] sm:$0xff]
    %v69 = vld [vmem:[#allocation7 + $0x10] sm:$0xff]
    %v70 = vld [vmem:[#allocation7 + $0x18] sm:$0xff]
    %v71 = vld [vmem:[#allocation7 + $0x20] sm:$0xff]
    %v72 = vld [vmem:[#allocation7 + $0x28] sm:$0xff]
    %v73 = vld [vmem:[#allocation7 + $0x30] sm:$0xff]
    %v74 = vld [vmem:[#allocation7 + $0x38] sm:$0xff]
    %v75 = vld [vmem:[#allocation7 + $0x40] sm:$0xff]
    %v76 = vld [vmem:[#allocation7 + $0x48] sm:$0xff]
    %v77 = vld [vmem:[#allocation7 + $0x50] sm:$0xff]
    %v78 = vld [vmem:[#allocation7 + $0x58] sm:$0xff]
    %v79 = vld [vmem:[#allocation7 + $0x60] sm:$0xff]
    %v80 = vld [vmem:[#allocation7 + $0x68] sm:$0xff]
    %v81 = vld [vmem:[#allocation7 + $0x70] sm:$0xff]
    %v82 = vld [vmem:[#allocation7 + $0x78] sm:$0xff]
    %v83 = vld [vmem:[#allocation7 + $0x80] sm:$0xff]
    %v84 = vld [vmem:[#allocation7 + $0x88] sm:$0xff]
    %v85 = vld [vmem:[#allocation7 + $0x90] sm:$0xff]
    %v86 = vld [vmem:[#allocation7 + $0x98] sm:$0xff]
    %v87 = vld [vmem:[#allocation7 + $0xa0] sm:$0xff]
    %v88 = vld [vmem:[#allocation7 + $0xa8] sm:$0xff]
    %v89 = vld [vmem:[#allocation7 + $0xb0] sm:$0xff]
    %v90 = vld [vmem:[#allocation7 + $0xb8] sm:$0xff]
    %v91 = vld [vmem:[#allocation7 + $0xc0] sm:$0xff]
    %v92 = vld [vmem:[#allocation7 + $0xc8] sm:$0xff]
    %v93 = vld [vmem:[#allocation7 + $0xd0] sm:$0xff]
    %v94 = vld [vmem:[#allocation7 + $0xd8] sm:$0xff]
    %v95 = vld [vmem:[#allocation7 + $0xe0] sm:$0xff]
    %v96 = vld [vmem:[#allocation7 + $0xe8] sm:$0xff]
    %v97 = vld [vmem:[#allocation7 + $0xf0] sm:$0xff]
    %v98 = vld [vmem:[#allocation7 + $0xf8] sm:$0xff]
    %v99 = vld [vmem:[#allocation7 + $0x100] sm:$0xff]
    %vm100 = vcmask 261120
    %v102 = vsel %vm100, %v62, 0
    %v105 = vsel %vm100, %v63, 0
    %107 = vmatpush.msra.mxu0 0.0
    %108 = vmatpush.msra.mxu0 0.0
    %109 = vmatpush.msra.mxu0 0.0
    %110 = vmatpush.msra.mxu0 0.0
    %111 = vmatpush.msra.mxu0 0.0
    %112 = vmatpush.msra.mxu0 0.0
    %113 = vmatpush.msra.mxu0 0.0
    %114 = vmatpush.msra.mxu0 0.0
    %115 = vmatpush.msra.mxu0 0.0
    %116 = vmatpush.msra.mxu0 0.0
    %117 = vmatpush.msra.mxu0 0.0
    %118 = vmatpush.msra.mxu0 0.0
    %119 = vmatpush.msra.mxu0 %v70
    %120 = vmatpush.msra.mxu0 %v69
    %121 = vmatpush.msra.mxu0 %v68
    %122 = vmatpush.msra.mxu0 %v67
    %123 = vmatmul.f32.gmra.mxu0 %v102
    %v124 = vpop.f32.mrf.mxu0
    %v125 = vadd.f32 0.0, %v124
    %126 = vmatmul.f32.gmra.mxu0 %v105
    %v127 = vpop.f32.mrf.mxu0
    %v128 = vadd.f32 0.0, %v127
    %129 = vdwg.mxu0
    %132 = vrot.lane.b32.xlu0 %v125, 96
    %v133 = vpop.permute.xlu0 %132
    %134 = vrot.lane.b32.xlu0 %v128, 96
    %v135 = vpop.permute.xlu0 %134
    %vm136 = vcmask 130048
    %v137 = vsel %vm136, %v125, 0
    %v139 = vsel %vm136, %v128, 0
    %v141 = vsel %vm136, %v133, 0
    %v143 = vsel %vm136, %v135, 0
    %145 = vmatpush.xpose.msra.mxu0 0.0
    %146 = vmatpush.xpose.msra.mxu0 0.0
    %147 = vmatpush.xpose.msra.mxu0 0.0
    %148 = vmatpush.xpose.msra.mxu0 0.0
    %149 = vmatpush.xpose.msra.mxu0 0.0
    %150 = vmatpush.xpose.msra.mxu0 0.0
    %151 = vmatpush.xpose.msra.mxu0 0.0
    %152 = vmatpush.xpose.msra.mxu0 0.0
    %153 = vmatpush.xpose.msra.mxu0 0.0
    %154 = vmatpush.xpose.msra.mxu0 0.0
    %155 = vmatpush.xpose.msra.mxu0 0.0
    %156 = vmatpush.xpose.msra.mxu0 0.0
    %157 = vmatpush.xpose.msra.mxu0 0.0
    %158 = vmatpush.xpose.msra.mxu0 0.0
    %159 = vmatpush.xpose.msra.mxu0 %v143
    %160 = vmatpush.xpose.msra.mxu0 %v141
    %161 = vmatmul.f32.gmra.mxu0 %v137
    %v162 = vpop.f32.mrf.mxu0
    %v163 = vadd.f32 0.0, %v162
    %164 = vmatmul.f32.gmra.mxu0 %v139
    %v165 = vpop.f32.mrf.mxu0
    %v166 = vadd.f32 0.0, %v165
    %167 = vdwg.mxu0
    %v168 = vmul.f32 %v163, 0.25
    %v169 = vmul.f32 %v166, 0.25
    %v170 = vadd.f32 %v168, %v96
    %v171 = vadd.f32 %v169, %v97
    %v172 = vsel %vm136, %v170, -inf
    %173 = vmax.xlane.f32.xlu0 %v172
    %v174 = vpop.xlane.xlu0 %173
    %v175 = vsel %vm136, %v171, -inf
    %176 = vmax.xlane.f32.xlu0 %v175
    %v177 = vpop.xlane.xlu0 %176
    %v178 = vsub.f32 %v170, %v174
    %v179 = vsub.f32 %v171, %v177
    %v180 = vmul.f32 %v178, 1.442695
    %v181 = vpow.pop %v180
    %v182 = vmul.f32 %v179, 1.442695
    %v183 = vpow.pop %v182
    %v184 = vsel %vm136, %v181, 0.0
    %185 = vadd.xlane.f32.xlu0 %v184
    %v186 = vpop.xlane.xlu0 %185
    %v187 = vsel %vm136, %v183, 0.0
    %188 = vadd.xlane.f32.xlu0 %v187
    %v189 = vpop.xlane.xlu0 %188
    %v190 = vrcp.pop %v186
    %v191 = vmul.f32 %v186, %v190
    %v192 = vsub.f32 1.0, %v191
    %v193 = vmul.f32 %v190, %v192
    %v194 = vadd.f32 %v190, %v193
    %vm195 = vweird.f32 %v186
    %vm196 = vweird.f32 %v190
    %vm197 = vmor %vm195, %vm196
    %v198 = vsel %vm197, %v190, %v194
    %v199 = vand.u32 2147483647, %v186
    %vm200 = vcmp.eq.f32.partialorder %v199, 8.507059e+37
    %v201 = vand.u32 %v186, 2147483648
    %v202 = vor.u32 1.1754944e-38, %v201
    %v203 = vsel %vm200, %v202, %v198
    %v204 = vrcp.pop %v189
    %v205 = vmul.f32 %v189, %v204
    %v206 = vsub.f32 1.0, %v205
    %v207 = vmul.f32 %v204, %v206
    %v208 = vadd.f32 %v204, %v207
    %vm209 = vweird.f32 %v189
    %vm210 = vweird.f32 %v204
    %vm211 = vmor %vm209, %vm210
    %v212 = vsel %vm211, %v204, %v208
    %v213 = vand.u32 2147483647, %v189
    %vm214 = vcmp.eq.f32.partialorder %v213, 8.507059e+37
    %v215 = vand.u32 %v189, 2147483648
    %v216 = vor.u32 1.1754944e-38, %v215
    %v217 = vsel %vm214, %v216, %v212
    %v218 = vmul.f32 %v181, %v203
    %v219 = vmul.f32 %v183, %v217
    %220 = vrot.lane.b32.xlu0 %v125, 64
    %v221 = vpop.permute.xlu0 %220
    %222 = vrot.lane.b32.xlu0 %v128, 64
    %v223 = vpop.permute.xlu0 %222
    %v227 = vsel %vm136, %v218, 0
    %v230 = vsel %vm136, %v219, 0
    %232 = vmatpush.msra.mxu0 0.0
    %233 = vmatpush.msra.mxu0 0.0
    %234 = vmatpush.msra.mxu0 0.0
    %235 = vmatpush.msra.mxu0 0.0
    %236 = vmatpush.msra.mxu0 0.0
    %237 = vmatpush.msra.mxu0 0.0
    %238 = vmatpush.msra.mxu0 0.0
    %239 = vmatpush.msra.mxu0 0.0
    %240 = vmatpush.msra.mxu0 0.0
    %241 = vmatpush.msra.mxu0 0.0
    %242 = vmatpush.msra.mxu0 0.0
    %243 = vmatpush.msra.mxu0 0.0
    %244 = vmatpush.msra.mxu0 0.0
    %245 = vmatpush.msra.mxu0 0.0
    %246 = vmatpush.msra.mxu0 %v223
    %247 = vmatpush.msra.mxu0 %v221
    %248 = vmatmul.f32.gmra.mxu0 %v227
    %v249 = vpop.f32.mrf.mxu0
    %v250 = vadd.f32 0.0, %v249
    %251 = vmatmul.f32.gmra.mxu0 %v230
    %v252 = vpop.f32.mrf.mxu0
    %v253 = vadd.f32 0.0, %v252
    %254 = vdwg.mxu0
    %255 = vrot.lane.b32.xlu0 %v125, 112
    %v256 = vpop.permute.xlu0 %255
    %257 = vrot.lane.b32.xlu0 %v128, 112
    %v258 = vpop.permute.xlu0 %257
    %259 = vrot.lane.b32.xlu0 %v125, 80
    %v260 = vpop.permute.xlu0 %259
    %261 = vrot.lane.b32.xlu0 %v128, 80
    %v262 = vpop.permute.xlu0 %261
    %v263 = vsel %vm136, %v256, 0
    %v265 = vsel %vm136, %v258, 0
    %v267 = vsel %vm136, %v260, 0
    %v269 = vsel %vm136, %v262, 0
    %271 = vmatpush.xpose.msra.mxu0 0.0
    %272 = vmatpush.xpose.msra.mxu0 0.0
    %273 = vmatpush.xpose.msra.mxu0 0.0
    %274 = vmatpush.xpose.msra.mxu0 0.0
    %275 = vmatpush.xpose.msra.mxu0 0.0
    %276 = vmatpush.xpose.msra.mxu0 0.0
    %277 = vmatpush.xpose.msra.mxu0 0.0
    %278 = vmatpush.xpose.msra.mxu0 0.0
    %279 = vmatpush.xpose.msra.mxu0 0.0
    %280 = vmatpush.xpose.msra.mxu0 0.0
    %281 = vmatpush.xpose.msra.mxu0 0.0
    %282 = vmatpush.xpose.msra.mxu0 0.0
    %283 = vmatpush.xpose.msra.mxu0 0.0
    %284 = vmatpush.xpose.msra.mxu0 0.0
    %285 = vmatpush.xpose.msra.mxu0 %v269
    %286 = vmatpush.xpose.msra.mxu0 %v267
    %287 = vmatmul.f32.gmra.mxu0 %v263
    %v288 = vpop.f32.mrf.mxu0
    %v289 = vadd.f32 0.0, %v288
    %290 = vmatmul.f32.gmra.mxu0 %v265
    %v291 = vpop.f32.mrf.mxu0
    %v292 = vadd.f32 0.0, %v291
    %293 = vdwg.mxu0
    %v294 = vmul.f32 %v289, 0.25
    %v295 = vmul.f32 %v292, 0.25
    %v296 = vadd.f32 %v294, %v96
    %v297 = vadd.f32 %v295, %v97
    %v298 = vsel %vm136, %v296, -inf
    %299 = vmax.xlane.f32.xlu0 %v298
    %v300 = vpop.xlane.xlu0 %299
    %v301 = vsel %vm136, %v297, -inf
    %302 = vmax.xlane.f32.xlu0 %v301
    %v303 = vpop.xlane.xlu0 %302
    %v304 = vsub.f32 %v296, %v300
    %v305 = vsub.f32 %v297, %v303
    %v306 = vmul.f32 %v304, 1.442695
    %v307 = vpow.pop %v306
    %v308 = vmul.f32 %v305, 1.442695
    %v309 = vpow.pop %v308
    %v310 = vsel %vm136, %v307, 0.0
    %311 = vadd.xlane.f32.xlu0 %v310
    %v312 = vpop.xlane.xlu0 %311
    %v313 = vsel %vm136, %v309, 0.0
    %314 = vadd.xlane.f32.xlu0 %v313
    %v315 = vpop.xlane.xlu0 %314
    %v316 = vrcp.pop %v312
    %v317 = vmul.f32 %v312, %v316
    %v318 = vsub.f32 1.0, %v317
    %v319 = vmul.f32 %v316, %v318
    %v320 = vadd.f32 %v316, %v319
    %vm321 = vweird.f32 %v312
    %vm322 = vweird.f32 %v316
    %vm323 = vmor %vm321, %vm322
    %v324 = vsel %vm323, %v316, %v320
    %v325 = vand.u32 2147483647, %v312
    %vm326 = vcmp.eq.f32.partialorder %v325, 8.507059e+37
    %v327 = vand.u32 %v312, 2147483648
    %v328 = vor.u32 1.1754944e-38, %v327
    %v329 = vsel %vm326, %v328, %v324
    %v330 = vrcp.pop %v315
    %v331 = vmul.f32 %v315, %v330
    %v332 = vsub.f32 1.0, %v331
    %v333 = vmul.f32 %v330, %v332
    %v334 = vadd.f32 %v330, %v333
    %vm335 = vweird.f32 %v315
    %vm336 = vweird.f32 %v330
    %vm337 = vmor %vm335, %vm336
    %v338 = vsel %vm337, %v330, %v334
    %v339 = vand.u32 2147483647, %v315
    %vm340 = vcmp.eq.f32.partialorder %v339, 8.507059e+37
    %v341 = vand.u32 %v315, 2147483648
    %v342 = vor.u32 1.1754944e-38, %v341
    %v343 = vsel %vm340, %v342, %v338
    %v344 = vmul.f32 %v307, %v329
    %v345 = vmul.f32 %v309, %v343
    %346 = vrot.lane.b32.xlu0 %v125, 32
    %v347 = vpop.permute.xlu0 %346
    %348 = vrot.lane.b32.xlu0 %v128, 32
    %v349 = vpop.permute.xlu0 %348
    %v353 = vsel %vm136, %v344, 0
    %v356 = vsel %vm136, %v345, 0
    %358 = vmatpush.msra.mxu0 0.0
    %359 = vmatpush.msra.mxu0 0.0
    %360 = vmatpush.msra.mxu0 0.0
    %361 = vmatpush.msra.mxu0 0.0
    %362 = vmatpush.msra.mxu0 0.0
    %363 = vmatpush.msra.mxu0 0.0
    %364 = vmatpush.msra.mxu0 0.0
    %365 = vmatpush.msra.mxu0 0.0
    %366 = vmatpush.msra.mxu0 0.0
    %367 = vmatpush.msra.mxu0 0.0
    %368 = vmatpush.msra.mxu0 0.0
    %369 = vmatpush.msra.mxu0 0.0
    %370 = vmatpush.msra.mxu0 0.0
    %371 = vmatpush.msra.mxu0 0.0
    %372 = vmatpush.msra.mxu0 %v349
    %373 = vmatpush.msra.mxu0 %v347
    %374 = vmatmul.f32.gmra.mxu0 %v353
    %v375 = vpop.f32.mrf.mxu0
    %v376 = vadd.f32 0.0, %v375
    %377 = vmatmul.f32.gmra.mxu0 %v356
    %v378 = vpop.f32.mrf.mxu0
    %v379 = vadd.f32 0.0, %v378
    %380 = vdwg.mxu0
    %383 = vrot.lane.b32.xlu0 %v376, 32
    %v384 = vpop.permute.xlu0 %383
    %385 = vrot.lane.b32.xlu0 %v379, 32
    %v386 = vpop.permute.xlu0 %385
    %v389 = vsel %vm100, %v250, %v384
    %v390 = vsel %vm100, %v253, %v386
    %vm391 = vcmask 523264
    %v393 = vsel %vm391, %v389, 0
    %v396 = vsel %vm391, %v390, 0
    %398 = vmatpush.msra.mxu0 0.0
    %399 = vmatpush.msra.mxu0 0.0
    %400 = vmatpush.msra.mxu0 0.0
    %401 = vmatpush.msra.mxu0 0.0
    %402 = vmatpush.msra.mxu0 0.0
    %403 = vmatpush.msra.mxu0 0.0
    %404 = vmatpush.msra.mxu0 0.0
    %405 = vmatpush.msra.mxu0 0.0
    %406 = vmatpush.msra.mxu0 %v86
    %407 = vmatpush.msra.mxu0 %v85
    %408 = vmatpush.msra.mxu0 %v84
    %409 = vmatpush.msra.mxu0 %v83
    %410 = vmatpush.msra.mxu0 %v82
    %411 = vmatpush.msra.mxu0 %v81
    %412 = vmatpush.msra.mxu0 %v80
    %413 = vmatpush.msra.mxu0 %v79
    %414 = vmatmul.f32.gmra.mxu0 %v393
    %v415 = vpop.f32.mrf.mxu0
    %v416 = vadd.f32 0.0, %v415
    %417 = vmatmul.f32.gmra.mxu0 %v396
    %v418 = vpop.f32.mrf.mxu0
    %v419 = vadd.f32 0.0, %v418
    %420 = vdwg.mxu0
    %v421 = vadd.f32 %v62, %v416
    %v422 = vadd.f32 %v63, %v419
    %v423 = vsel %vm100, %v421, 0.0
    %424 = vadd.xlane.f32.xlu0 %v423
    %v425 = vpop.xlane.xlu0 %424
    %v426 = vsel %vm100, %v422, 0.0
    %427 = vadd.xlane.f32.xlu0 %v426
    %v428 = vpop.xlane.xlu0 %427
    %v429 = vrcp.pop 32.0
    %v430 = vmul.f32 32.0, %v429
    %v431 = vsub.f32 1.0, %v430
    %v432 = vmul.f32 %v429, %v431
    %v433 = vadd.f32 %v429, %v432
    %vm434 = vweird.f32 %v429
    %v435 = vsel %vm434, %v429, %v433
    %v436 = vmul.f32 %v425, %v435
    %v437 = vmul.f32 %v428, %v435
    %v438 = vsub.f32 %v421, %v436
    %v439 = vsub.f32 %v422, %v437
    %v440 = vmul.f32 %v438, %v438
    %v441 = vmul.f32 %v439, %v439
    %v442 = vsel %vm100, %v440, 0.0
    %443 = vadd.xlane.f32.xlu0 %v442
    %v444 = vpop.xlane.xlu0 %443
    %v445 = vsel %vm100, %v441, 0.0
    %446 = vadd.xlane.f32.xlu0 %v445
    %v447 = vpop.xlane.xlu0 %446
    %v448 = vmul.f32 %v444, %v435
    %v449 = vmul.f32 %v447, %v435
    %v450 = vadd.f32 %v448, 1e-05
    %v451 = vadd.f32 %v449, 1e-05
    %v452 = vrsqrt.pop %v450
    %v453 = vmul.f32 %v452, %v450
    %v454 = vmul.f32 %v453, %v452
    %v455 = vmul.f32 0.5, %v454
    %v456 = vsub.f32 1.5, %v455
    %v457 = vmul.f32 %v452, %v456
    %vm458 = vweird.f32 %v450
    %vm459 = vweird.f32 %v452
    %vm460 = vmor %vm458, %vm459
    %v461 = vsel %vm460, %v452, %v457
    %v462 = vrsqrt.pop %v451
    %v463 = vmul.f32 %v462, %v451
    %v464 = vmul.f32 %v463, %v462
    %v465 = vmul.f32 0.5, %v464
    %v466 = vsub.f32 1.5, %v465
    %v467 = vmul.f32 %v462, %v466
    %vm468 = vweird.f32 %v451
    %vm469 = vweird.f32 %v462
    %vm470 = vmor %vm468, %vm469
    %v471 = vsel %vm470, %v462, %v467
    %v472 = vmul.f32 %v438, %v461
    %v473 = vmul.f32 %v439, %v471
    %v474 = vperm.slane %v95, 2
    %v475 = vmul.f32 %v472, %v474
    %v476 = vmul.f32 %v473, %v474
    %v477 = vperm.slane %v95, 3
    %v478 = vadd.f32 %v475, %v477
    %v479 = vadd.f32 %v476, %v477
    %v481 = vsel %vm100, %v478, 0
    %v484 = vsel %vm100, %v479, 0
    %486 = vmatpush.msra.mxu0 0.0
    %487 = vmatpush.msra.mxu0 0.0
    %488 = vmatpush.msra.mxu0 0.0
    %489 = vmatpush.msra.mxu0 0.0
    %490 = vmatpush.msra.mxu0 0.0
    %491 = vmatpush.msra.mxu0 0.0
    %492 = vmatpush.msra.mxu0 0.0
    %493 = vmatpush.msra.mxu0 0.0
    %494 = vmatpush.msra.mxu0 0.0
    %495 = vmatpush.msra.mxu0 0.0
    %496 = vmatpush.msra.mxu0 0.0
    %497 = vmatpush.msra.mxu0 0.0
    %498 = vmatpush.msra.mxu0 %v74
    %499 = vmatpush.msra.mxu0 %v73
    %500 = vmatpush.msra.mxu0 %v72
    %501 = vmatpush.msra.mxu0 %v71
    %502 = vmatmul.f32.gmra.mxu0 %v481
    %v503 = vpop.f32.mrf.mxu0
    %v504 = vadd.f32 0.0, %v503
    %505 = vmatmul.f32.gmra.mxu0 %v484
    %v506 = vpop.f32.mrf.mxu0
    %v507 = vadd.f32 0.0, %v506
    %508 = vdwg.mxu0
    %513 = vrot.lane.b32.xlu0 %v71, 96
    %v514 = vpop.permute.xlu0 %513
    %515 = vrot.lane.b32.xlu0 %v72, 96
    %v516 = vpop.permute.xlu0 %515
    %517 = vrot.lane.b32.xlu0 %v73, 96
    %v518 = vpop.permute.xlu0 %517
    %519 = vrot.lane.b32.xlu0 %v74, 96
    %v520 = vpop.permute.xlu0 %519
    %v526 = vsel %vm100, %v64, 0
    %v529 = vsel %vm100, %v65, 0
    %v532 = vsel %vm100, %v66, 0
    %534 = vmatpush.msra.mxu0 0.0
    %535 = vmatpush.msra.mxu0 0.0
    %536 = vmatpush.msra.mxu0 0.0
    %537 = vmatpush.msra.mxu0 0.0
    %538 = vmatpush.msra.mxu0 0.0
    %539 = vmatpush.msra.mxu0 0.0
    %540 = vmatpush.msra.mxu0 0.0
    %541 = vmatpush.msra.mxu0 0.0
    %542 = vmatpush.msra.mxu0 0.0
    %543 = vmatpush.msra.mxu0 0.0
    %544 = vmatpush.msra.mxu0 0.0
    %545 = vmatpush.msra.mxu0 0.0
    %546 = vmatpush.msra.mxu0 %v520
    %547 = vmatpush.msra.mxu0 %v518
    %548 = vmatpush.msra.mxu0 %v516
    %549 = vmatpush.msra.mxu0 %v514
    %550 = vmatmul.f32.gmra.mxu0 %v526
    %v551 = vpop.f32.mrf.mxu0
    %v552 = vadd.f32 0.0, %v551
    %553 = vmatmul.f32.gmra.mxu0 %v529
    %v554 = vpop.f32.mrf.mxu0
    %v555 = vadd.f32 0.0, %v554
    %556 = vmatmul.f32.gmra.mxu0 %v532
    %v557 = vpop.f32.mrf.mxu0
    %v558 = vadd.f32 0.0, %v557
    %559 = vdwg.mxu0
    %v561 = vsel %vm136, %v504, 0
    %v564 = vsel %vm136, %v507, 0
    %v567 = vsel %vm136, %v552, 0
    %v570 = vsel %vm136, %v555, 0
    %v573 = vsel %vm136, %v558, 0
    %575 = vmatpush.xpose.msra.mxu0 0.0
    %576 = vmatpush.xpose.msra.mxu0 0.0
    %577 = vmatpush.xpose.msra.mxu0 0.0
    %578 = vmatpush.xpose.msra.mxu0 0.0
    %579 = vmatpush.xpose.msra.mxu0 0.0
    %580 = vmatpush.xpose.msra.mxu0 0.0
    %581 = vmatpush.xpose.msra.mxu0 0.0
    %582 = vmatpush.xpose.msra.mxu0 0.0
    %583 = vmatpush.xpose.msra.mxu0 0.0
    %584 = vmatpush.xpose.msra.mxu0 0.0
    %585 = vmatpush.xpose.msra.mxu0 0.0
    %586 = vmatpush.xpose.msra.mxu0 0.0
    %587 = vmatpush.xpose.msra.mxu0 0.0
    %588 = vmatpush.xpose.msra.mxu0 %v573
    %589 = vmatpush.xpose.msra.mxu0 %v570
    %590 = vmatpush.xpose.msra.mxu0 %v567
    %591 = vmatmul.f32.gmra.mxu0 %v561
    %v592 = vpop.f32.mrf.mxu0
    %v593 = vadd.f32 0.0, %v592
    %594 = vmatmul.f32.gmra.mxu0 %v564
    %v595 = vpop.f32.mrf.mxu0
    %v596 = vadd.f32 0.0, %v595
    %597 = vdwg.mxu0
    %v598 = vmul.f32 %v593, 0.25
    %v599 = vmul.f32 %v596, 0.25
    %v600 = vadd.f32 %v598, %v98
    %v601 = vadd.f32 %v599, %v99
    %vm602 = vcmask 195584
    %v603 = vsel %vm602, %v600, -inf
    %604 = vmax.xlane.f32.xlu0 %v603
    %v605 = vpop.xlane.xlu0 %604
    %v606 = vsel %vm602, %v601, -inf
    %607 = vmax.xlane.f32.xlu0 %v606
    %v608 = vpop.xlane.xlu0 %607
    %v609 = vsub.f32 %v600, %v605
    %v610 = vsub.f32 %v601, %v608
    %v611 = vmul.f32 %v609, 1.442695
    %v612 = vpow.pop %v611
    %v613 = vmul.f32 %v610, 1.442695
    %v614 = vpow.pop %v613
    %v615 = vsel %vm602, %v612, 0.0
    %616 = vadd.xlane.f32.xlu0 %v615
    %v617 = vpop.xlane.xlu0 %616
    %v618 = vsel %vm602, %v614, 0.0
    %619 = vadd.xlane.f32.xlu0 %v618
    %v620 = vpop.xlane.xlu0 %619
    %v621 = vrcp.pop %v617
    %v622 = vmul.f32 %v617, %v621
    %v623 = vsub.f32 1.0, %v622
    %v624 = vmul.f32 %v621, %v623
    %v625 = vadd.f32 %v621, %v624
    %vm626 = vweird.f32 %v617
    %vm627 = vweird.f32 %v621
    %vm628 = vmor %vm626, %vm627
    %v629 = vsel %vm628, %v621, %v625
    %v630 = vand.u32 2147483647, %v617
    %vm631 = vcmp.eq.f32.partialorder %v630, 8.507059e+37
    %v632 = vand.u32 %v617, 2147483648
    %v633 = vor.u32 1.1754944e-38, %v632
    %v634 = vsel %vm631, %v633, %v629
    %v635 = vrcp.pop %v620
    %v636 = vmul.f32 %v620, %v635
    %v637 = vsub.f32 1.0, %v636
    %v638 = vmul.f32 %v635, %v637
    %v639 = vadd.f32 %v635, %v638
    %vm640 = vweird.f32 %v620
    %vm641 = vweird.f32 %v635
    %vm642 = vmor %vm640, %vm641
    %v643 = vsel %vm642, %v635, %v639
    %v644 = vand.u32 2147483647, %v620
    %vm645 = vcmp.eq.f32.partialorder %v644, 8.507059e+37
    %v646 = vand.u32 %v620, 2147483648
    %v647 = vor.u32 1.1754944e-38, %v646
    %v648 = vsel %vm645, %v647, %v643
    %v649 = vmul.f32 %v612, %v634
    %v650 = vmul.f32 %v614, %v648
    %651 = vrot.lane.b32.xlu0 %v552, 96
    %v652 = vpop.permute.xlu0 %651
    %653 = vrot.lane.b32.xlu0 %v555, 96
    %v654 = vpop.permute.xlu0 %653
    %655 = vrot.lane.b32.xlu0 %v558, 96
    %v656 = vpop.permute.xlu0 %655
    %v661 = vsel %vm602, %v649, 0
    %v664 = vsel %vm602, %v650, 0
    %666 = vmatpush.msra.mxu0 0.0
    %667 = vmatpush.msra.mxu0 0.0
    %668 = vmatpush.msra.mxu0 0.0
    %669 = vmatpush.msra.mxu0 0.0
    %670 = vmatpush.msra.mxu0 0.0
    %671 = vmatpush.msra.mxu0 0.0
    %672 = vmatpush.msra.mxu0 0.0
    %673 = vmatpush.msra.mxu0 0.0
    %674 = vmatpush.msra.mxu0 0.0
    %675 = vmatpush.msra.mxu0 0.0
    %676 = vmatpush.msra.mxu0 0.0
    %677 = vmatpush.msra.mxu0 0.0
    %678 = vmatpush.msra.mxu0 0.0
    %679 = vmatpush.msra.mxu0 %v656
    %680 = vmatpush.msra.mxu0 %v654
    %681 = vmatpush.msra.mxu0 %v652
    %682 = vmatmul.f32.gmra.mxu0 %v661
    %v683 = vpop.f32.mrf.mxu0
    %v684 = vadd.f32 0.0, %v683
    %685 = vmatmul.f32.gmra.mxu0 %v664
    %v686 = vpop.f32.mrf.mxu0
    %v687 = vadd.f32 0.0, %v686
    %688 = vdwg.mxu0
    %689 = vrot.lane.b32.xlu0 %v504, 112
    %v690 = vpop.permute.xlu0 %689
    %691 = vrot.lane.b32.xlu0 %v507, 112
    %v692 = vpop.permute.xlu0 %691
    %693 = vrot.lane.b32.xlu0 %v552, 112
    %v694 = vpop.permute.xlu0 %693
    %695 = vrot.lane.b32.xlu0 %v555, 112
    %v696 = vpop.permute.xlu0 %695
    %697 = vrot.lane.b32.xlu0 %v558, 112
    %v698 = vpop.permute.xlu0 %697
    %v699 = vsel %vm136, %v690, 0
    %v701 = vsel %vm136, %v692, 0
    %v703 = vsel %vm136, %v694, 0
    %v705 = vsel %vm136, %v696, 0
    %v707 = vsel %vm136, %v698, 0
    %709 = vmatpush.xpose.msra.mxu0 0.0
    %710 = vmatpush.xpose.msra.mxu0 0.0
    %711 = vmatpush.xpose.msra.mxu0 0.0
    %712 = vmatpush.xpose.msra.mxu0 0.0
    %713 = vmatpush.xpose.msra.mxu0 0.0
    %714 = vmatpush.xpose.msra.mxu0 0.0
    %715 = vmatpush.xpose.msra.mxu0 0.0
    %716 = vmatpush.xpose.msra.mxu0 0.0
    %717 = vmatpush.xpose.msra.mxu0 0.0
    %718 = vmatpush.xpose.msra.mxu0 0.0
    %719 = vmatpush.xpose.msra.mxu0 0.0
    %720 = vmatpush.xpose.msra.mxu0 0.0
    %721 = vmatpush.xpose.msra.mxu0 0.0
    %722 = vmatpush.xpose.msra.mxu0 %v707
    %723 = vmatpush.xpose.msra.mxu0 %v705
    %724 = vmatpush.xpose.msra.mxu0 %v703
    %725 = vmatmul.f32.gmra.mxu0 %v699
    %v726 = vpop.f32.mrf.mxu0
    %v727 = vadd.f32 0.0, %v726
    %728 = vmatmul.f32.gmra.mxu0 %v701
    %v729 = vpop.f32.mrf.mxu0
    %v730 = vadd.f32 0.0, %v729
    %731 = vdwg.mxu0
    %v732 = vmul.f32 %v727, 0.25
    %v733 = vmul.f32 %v730, 0.25
    %v734 = vadd.f32 %v732, %v98
    %v735 = vadd.f32 %v733, %v99
    %v736 = vsel %vm602, %v734, -inf
    %737 = vmax.xlane.f32.xlu0 %v736
    %v738 = vpop.xlane.xlu0 %737
    %v739 = vsel %vm602, %v735, -inf
    %740 = vmax.xlane.f32.xlu0 %v739
    %v741 = vpop.xlane.xlu0 %740
    %v742 = vsub.f32 %v734, %v738
    %v743 = vsub.f32 %v735, %v741
    %v744 = vmul.f32 %v742, 1.442695
    %v745 = vpow.pop %v744
    %v746 = vmul.f32 %v743, 1.442695
    %v747 = vpow.pop %v746
    %v748 = vsel %vm602, %v745, 0.0
    %749 = vadd.xlane.f32.xlu0 %v748
    %v750 = vpop.xlane.xlu0 %749
    %v751 = vsel %vm602, %v747, 0.0
    %752 = vadd.xlane.f32.xlu0 %v751
    %v753 = vpop.xlane.xlu0 %752
    %v754 = vrcp.pop %v750
    %v755 = vmul.f32 %v750, %v754
    %v756 = vsub.f32 1.0, %v755
    %v757 = vmul.f32 %v754, %v756
    %v758 = vadd.f32 %v754, %v757
    %vm759 = vweird.f32 %v750
    %vm760 = vweird.f32 %v754
    %vm761 = vmor %vm759, %vm760
    %v762 = vsel %vm761, %v754, %v758
    %v763 = vand.u32 2147483647, %v750
    %vm764 = vcmp.eq.f32.partialorder %v763, 8.507059e+37
    %v765 = vand.u32 %v750, 2147483648
    %v766 = vor.u32 1.1754944e-38, %v765
    %v767 = vsel %vm764, %v766, %v762
    %v768 = vrcp.pop %v753
    %v769 = vmul.f32 %v753, %v768
    %v770 = vsub.f32 1.0, %v769
    %v771 = vmul.f32 %v768, %v770
    %v772 = vadd.f32 %v768, %v771
    %vm773 = vweird.f32 %v753
    %vm774 = vweird.f32 %v768
    %vm775 = vmor %vm773, %vm774
    %v776 = vsel %vm775, %v768, %v772
    %v777 = vand.u32 2147483647, %v753
    %vm778 = vcmp.eq.f32.partialorder %v777, 8.507059e+37
    %v779 = vand.u32 %v753, 2147483648
    %v780 = vor.u32 1.1754944e-38, %v779
    %v781 = vsel %vm778, %v780, %v776
    %v782 = vmul.f32 %v745, %v767
    %v783 = vmul.f32 %v747, %v781
    %784 = vrot.lane.b32.xlu0 %v552, 64
    %v785 = vpop.permute.xlu0 %784
    %786 = vrot.lane.b32.xlu0 %v555, 64
    %v787 = vpop.permute.xlu0 %786
    %788 = vrot.lane.b32.xlu0 %v558, 64
    %v789 = vpop.permute.xlu0 %788
    %v794 = vsel %vm602, %v782, 0
    %v797 = vsel %vm602, %v783, 0
    %799 = vmatpush.msra.mxu0 0.0
    %800 = vmatpush.msra.mxu0 0.0
    %801 = vmatpush.msra.mxu0 0.0
    %802 = vmatpush.msra.mxu0 0.0
    %803 = vmatpush.msra.mxu0 0.0
    %804 = vmatpush.msra.mxu0 0.0
    %805 = vmatpush.msra.mxu0 0.0
    %806 = vmatpush.msra.mxu0 0.0
    %807 = vmatpush.msra.mxu0 0.0
    %808 = vmatpush.msra.mxu0 0.0
    %809 = vmatpush.msra.mxu0 0.0
    %810 = vmatpush.msra.mxu0 0.0
    %811 = vmatpush.msra.mxu0 0.0
    %812 = vmatpush.msra.mxu0 %v789
    %813 = vmatpush.msra.mxu0 %v787
    %814 = vmatpush.msra.mxu0 %v785
    %815 = vmatmul.f32.gmra.mxu0 %v794
    %v816 = vpop.f32.mrf.mxu0
    %v817 = vadd.f32 0.0, %v816
    %818 = vmatmul.f32.gmra.mxu0 %v797
    %v819 = vpop.f32.mrf.mxu0
    %v820 = vadd.f32 0.0, %v819
    %821 = vdwg.mxu0
    %824 = vrot.lane.b32.xlu0 %v817, 32
    %v825 = vpop.permute.xlu0 %824
    %826 = vrot.lane.b32.xlu0 %v820, 32
    %v827 = vpop.permute.xlu0 %826
    %v830 = vsel %vm100, %v684, %v825
    %v831 = vsel %vm100, %v687, %v827
    %840 = vrot.lane.b32.xlu0 %v79, 96
    %v841 = vpop.permute.xlu0 %840
    %842 = vrot.lane.b32.xlu0 %v80, 96
    %v843 = vpop.permute.xlu0 %842
    %844 = vrot.lane.b32.xlu0 %v81, 96
    %v845 = vpop.permute.xlu0 %844
    %846 = vrot.lane.b32.xlu0 %v82, 96
    %v847 = vpop.permute.xlu0 %846
    %848 = vrot.lane.b32.xlu0 %v83, 96
    %v849 = vpop.permute.xlu0 %848
    %850 = vrot.lane.b32.xlu0 %v84, 96
    %v851 = vpop.permute.xlu0 %850
    %852 = vrot.lane.b32.xlu0 %v85, 96
    %v853 = vpop.permute.xlu0 %852
    %854 = vrot.lane.b32.xlu0 %v86, 96
    %v855 = vpop.permute.xlu0 %854
    %v865 = vsel %vm391, %v830, 0
    %v868 = vsel %vm391, %v831, 0
    %870 = vmatpush.msra.mxu0 0.0
    %871 = vmatpush.msra.mxu0 0.0
    %872 = vmatpush.msra.mxu0 0.0
    %873 = vmatpush.msra.mxu0 0.0
    %874 = vmatpush.msra.mxu0 0.0
    %875 = vmatpush.msra.mxu0 0.0
    %876 = vmatpush.msra.mxu0 0.0
    %877 = vmatpush.msra.mxu0 0.0
    %878 = vmatpush.msra.mxu0 %v855
    %879 = vmatpush.msra.mxu0 %v853
    %880 = vmatpush.msra.mxu0 %v851
    %881 = vmatpush.msra.mxu0 %v849
    %882 = vmatpush.msra.mxu0 %v847
    %883 = vmatpush.msra.mxu0 %v845
    %884 = vmatpush.msra.mxu0 %v843
    %885 = vmatpush.msra.mxu0 %v841
    %886 = vmatmul.f32.gmra.mxu0 %v865
    %v887 = vpop.f32.mrf.mxu0
    %v888 = vadd.f32 0.0, %v887
    %889 = vmatmul.f32.gmra.mxu0 %v868
    %v890 = vpop.f32.mrf.mxu0
    %v891 = vadd.f32 0.0, %v890
    %892 = vdwg.mxu0
    %v893 = vadd.f32 %v478, %v888
    %v894 = vadd.f32 %v479, %v891
    %v895 = vsel %vm100, %v893, 0.0
    %896 = vadd.xlane.f32.xlu0 %v895
    %v897 = vpop.xlane.xlu0 %896
    %v898 = vsel %vm100, %v894, 0.0
    %899 = vadd.xlane.f32.xlu0 %v898
    %v900 = vpop.xlane.xlu0 %899
    %v901 = vmul.f32 %v897, %v435
    %v902 = vmul.f32 %v900, %v435
    %v903 = vsub.f32 %v893, %v901
    %v904 = vsub.f32 %v894, %v902
    %v905 = vmul.f32 %v903, %v903
    %v906 = vmul.f32 %v904, %v904
    %v907 = vsel %vm100, %v905, 0.0
    %908 = vadd.xlane.f32.xlu0 %v907
    %v909 = vpop.xlane.xlu0 %908
    %v910 = vsel %vm100, %v906, 0.0
    %911 = vadd.xlane.f32.xlu0 %v910
    %v912 = vpop.xlane.xlu0 %911
    %v913 = vmul.f32 %v909, %v435
    %v914 = vmul.f32 %v912, %v435
    %v915 = vadd.f32 %v913, 1e-05
    %v916 = vadd.f32 %v914, 1e-05
    %v917 = vrsqrt.pop %v915
    %v918 = vmul.f32 %v917, %v915
    %v919 = vmul.f32 %v918, %v917
    %v920 = vmul.f32 0.5, %v919
    %v921 = vsub.f32 1.5, %v920
    %v922 = vmul.f32 %v917, %v921
    %vm923 = vweird.f32 %v915
    %vm924 = vweird.f32 %v917
    %vm925 = vmor %vm923, %vm924
    %v926 = vsel %vm925, %v917, %v922
    %v927 = vrsqrt.pop %v916
    %v928 = vmul.f32 %v927, %v916
    %v929 = vmul.f32 %v928, %v927
    %v930 = vmul.f32 0.5, %v929
    %v931 = vsub.f32 1.5, %v930
    %v932 = vmul.f32 %v927, %v931
    %vm933 = vweird.f32 %v916
    %vm934 = vweird.f32 %v927
    %vm935 = vmor %vm933, %vm934
    %v936 = vsel %vm935, %v927, %v932
    %v937 = vmul.f32 %v903, %v926
    %v938 = vmul.f32 %v904, %v936
    %v939 = vperm.slane %v95, 4
    %v940 = vmul.f32 %v937, %v939
    %v941 = vmul.f32 %v938, %v939
    %v942 = vperm.slane %v95, 5
    %v943 = vadd.f32 %v940, %v942
    %v944 = vadd.f32 %v941, %v942
    %v945 = vperm.slane %v95, 0
    %v947 = vsel %vm100, %v943, 0
    %v950 = vsel %vm100, %v944, 0
    %952 = vmatpush.msra.mxu0 0.0
    %953 = vmatpush.msra.mxu0 0.0
    %954 = vmatpush.msra.mxu0 0.0
    %955 = vmatpush.msra.mxu0 0.0
    %956 = vmatpush.msra.mxu0 0.0
    %957 = vmatpush.msra.mxu0 0.0
    %958 = vmatpush.msra.mxu0 0.0
    %959 = vmatpush.msra.mxu0 0.0
    %960 = vmatpush.msra.mxu0 0.0
    %961 = vmatpush.msra.mxu0 0.0
    %962 = vmatpush.msra.mxu0 0.0
    %963 = vmatpush.msra.mxu0 0.0
    %964 = vmatpush.msra.mxu0 %v78
    %965 = vmatpush.msra.mxu0 %v77
    %966 = vmatpush.msra.mxu0 %v76
    %967 = vmatpush.msra.mxu0 %v75
    %968 = vmatmul.f32.gmra.mxu0 %v947
    %v969 = vpop.f32.mrf.mxu0
    %v970 = vadd.f32 %v945, %v969
    %971 = vmatmul.f32.gmra.mxu0 %v950
    %v972 = vpop.f32.mrf.mxu0
    %v973 = vadd.f32 %v945, %v972
    %974 = vdwg.mxu0
    %v975 = vmax.f32 %v970, 0.0
    %v976 = vmax.f32 %v973, 0.0
    %v977 = vperm.slane %v95, 1
    %v979 = vsel %vm391, %v975, 0
    %v982 = vsel %vm391, %v976, 0
    %984 = vmatpush.msra.mxu0 0.0
    %985 = vmatpush.msra.mxu0 0.0
    %986 = vmatpush.msra.mxu0 0.0
    %987 = vmatpush.msra.mxu0 0.0
    %988 = vmatpush.msra.mxu0 0.0
    %989 = vmatpush.msra.mxu0 0.0
    %990 = vmatpush.msra.mxu0 0.0
    %991 = vmatpush.msra.mxu0 0.0
    %992 = vmatpush.msra.mxu0 %v94
    %993 = vmatpush.msra.mxu0 %v93
    %994 = vmatpush.msra.mxu0 %v92
    %995 = vmatpush.msra.mxu0 %v91
    %996 = vmatpush.msra.mxu0 %v90
    %997 = vmatpush.msra.mxu0 %v89
    %998 = vmatpush.msra.mxu0 %v88
    %999 = vmatpush.msra.mxu0 %v87
    %1000 = vmatmul.f32.gmra.mxu0 %v979
    %v1001 = vpop.f32.mrf.mxu0
    %v1002 = vadd.f32 %v977, %v1001
    %1003 = vmatmul.f32.gmra.mxu0 %v982
    %v1004 = vpop.f32.mrf.mxu0
    %v1005 = vadd.f32 %v977, %v1004
    %1006 = vdwg.mxu0
    %v1007 = vadd.f32 %v943, %v1002
    %v1008 = vadd.f32 %v944, %v1005
    %v1009 = vsel %vm100, %v1007, 0.0
    %1010 = vadd.xlane.f32.xlu0 %v1009
    %v1011 = vpop.xlane.xlu0 %1010
    %v1012 = vsel %vm100, %v1008, 0.0
    %1013 = vadd.xlane.f32.xlu0 %v1012
    %v1014 = vpop.xlane.xlu0 %1013
    %v1015 = vmul.f32 %v1011, %v435
    %v1016 = vmul.f32 %v1014, %v435
    %v1017 = vsub.f32 %v1007, %v1015
    %v1018 = vsub.f32 %v1008, %v1016
    %v1019 = vmul.f32 %v1017, %v1017
    %v1020 = vmul.f32 %v1018, %v1018
    %v1021 = vsel %vm100, %v1019, 0.0
    %1022 = vadd.xlane.f32.xlu0 %v1021
    %v1023 = vpop.xlane.xlu0 %1022
    %v1024 = vsel %vm100, %v1020, 0.0
    %1025 = vadd.xlane.f32.xlu0 %v1024
    %v1026 = vpop.xlane.xlu0 %1025
    %v1027 = vmul.f32 %v1023, %v435
    %v1028 = vmul.f32 %v1026, %v435
    %v1029 = vadd.f32 %v1027, 1e-05
    %v1030 = vadd.f32 %v1028, 1e-05
    %v1031 = vrsqrt.pop %v1029
    %v1032 = vmul.f32 %v1031, %v1029
    %v1033 = vmul.f32 %v1032, %v1031
    %v1034 = vmul.f32 0.5, %v1033
    %v1035 = vsub.f32 1.5, %v1034
    %v1036 = vmul.f32 %v1031, %v1035
    %vm1037 = vweird.f32 %v1029
    %vm1038 = vweird.f32 %v1031
    %vm1039 = vmor %vm1037, %vm1038
    %v1040 = vsel %vm1039, %v1031, %v1036
    %v1041 = vrsqrt.pop %v1030
    %v1042 = vmul.f32 %v1041, %v1030
    %v1043 = vmul.f32 %v1042, %v1041
    %v1044 = vmul.f32 0.5, %v1043
    %v1045 = vsub.f32 1.5, %v1044
    %v1046 = vmul.f32 %v1041, %v1045
    %vm1047 = vweird.f32 %v1030
    %vm1048 = vweird.f32 %v1041
    %vm1049 = vmor %vm1047, %vm1048
    %v1050 = vsel %vm1049, %v1041, %v1046
    %v1051 = vmul.f32 %v1017, %v1040
    %v1052 = vmul.f32 %v1018, %v1050
    %v1053 = vperm.slane %v95, 6
    %v1054 = vmul.f32 %v1051, %v1053
    %v1055 = vmul.f32 %v1052, %v1053
    %v1056 = vperm.slane %v95, 7
    %v1057 = vadd.f32 %v1054, %v1056
    %v1058 = vadd.f32 %v1055, %v1056
    %1059 = vst.msk [vmem:[#allocation8] sm:$0xff] %vm100, %v1057
    %1060 = vst.msk [vmem:[#allocation8 + $0x8] sm:$0xff] %vm100, %v1058
    // Predicated region
    $region26: #{tpu_custom_call.1} parent=1 // pred_check
      _
    $region27: #{tpu_custom_call.1} parent=1 // pred_check_branch
      %1062 = sbr.rel (0) target = $region29
    $region28: #{tpu_custom_call.1} parent=1 // pred_region
      %1064 = vsyncadd [#allocation4], 0
      %s1065 = sshll.u32 [#allocation8], 4
      %s1066 = int_to_ptr.vmem [resolvable:$true] %s1065
      %s1067 = sshll.u32 %s3, 4
      %s1068 = int_to_ptr.hbm [resolvable:$true] %s1067
      %1073 = dma.vmem_to_hbm [thread:$0]  %s1066, 256, %s1068, [#allocation4], 128, 128, 8
    $region29: #{tpu_custom_call.1} parent=1 // pred_fallthru
      _
    // Predicated region
    $region30: #{tpu_custom_call.1} parent=1 // pred_check
      _
    $region31: #{tpu_custom_call.1} parent=1 // pred_check_branch
      %1075 = sbr.rel (0) target = $region33
    $region32: #{tpu_custom_call.1} parent=1 // pred_region
      %1077 = dma.done [#allocation4], 256
    $region33: #{tpu_custom_call.1} parent=1 // pred_fallthru
      _
    %1078 = vsyncpa [#allocation3], 1
    %1079 = vsyncpa [#allocation6], 1
    %1080 = vsyncpa [#allocation4], 1

</llo_original>
